<compile_context>
chip_gen: v5e
topology: v5e:2x2
jax: 0.10.0
libtpu: 0.0.40
codegen_flags: <defaults>
</compile_context>

<pallas_src>
import functools

import jax
import jax.numpy as jnp
from jax import lax
from jax.experimental import pallas as pl
from jax.experimental.pallas import tpu as pltpu


def netvlad_kernel(x_ref, w_ref, cent_ref, soft_ref, res_ref, vlad_ref,
                   *, hw_valid, hw_padded, tile_hw, k_chunk):
    # x_ref    : (1, C, tile_hw)     input pixels of this hw tile
    # w_ref    : (K, C)              1x1 conv weight (grid-constant)
    # cent_ref : (K, C)              centroids      (grid-constant)
    # soft_ref : (1, K, tile_hw)     softmax over clusters for this tile
    # res_ref  : (1, K, C, tile_hw)  weighted residual for this tile
    # vlad_ref : (1, K, C)           accumulator, resident across the t axis
    t = pl.program_id(2)

    x = x_ref[0]            # (C, tile_hw)
    w = w_ref[...]          # (K, C)
    cents = cent_ref[...]   # (K, C)
    K = w.shape[0]

    # --- descriptor-wise L2 normalization over channels (EUP rsqrt, no divide)
    ssq = jnp.sum(x * x, axis=0, keepdims=True)             # (1, tile_hw)
    xn = x * lax.rsqrt(jnp.maximum(ssq, 1e-24))             # == x / max(||x||, 1e-12)

    # --- 1x1 conv (no bias) -> cluster logits on the MXU
    logits = jnp.dot(w, xn, preferred_element_type=jnp.float32)   # (K, tile_hw)

    # --- softmax over clusters (axis 0); EUP reciprocal + 2 Newton steps
    m = jnp.max(logits, axis=0, keepdims=True)
    e = jnp.exp(logits - m)
    denom = jnp.sum(e, axis=0, keepdims=True)               # (1, tile_hw)
    inv = pl.reciprocal(denom, approx=True)
    inv = inv * (2.0 - denom * inv)
    inv = inv * (2.0 - denom * inv)
    soft = e * inv                                          # (K, tile_hw)

    soft_ref[0] = soft

    # --- VLAD accumulation on the MXU (no reduction over the big tensor):
    #     vlad[k,c] += sum_p soft[k,p]*xn[c,p] - cent[k,c]*sum_p soft[k,p]
    @pl.when(t == 0)
    def _init():
        vlad_ref[...] = jnp.zeros_like(vlad_ref)

    if hw_padded != hw_valid:                               # static condition
        # Padded columns have xn == 0 exactly, so they contribute nothing to
        # the soft @ xn^T dot; only soft_sum needs the column-validity mask.
        g = pl.program_id(1) * pl.num_programs(2) + t       # global hw tile idx
        pix = g * tile_hw + lax.broadcasted_iota(jnp.int32, (1, tile_hw), 1)
        col_valid = (pix < hw_valid).astype(soft.dtype)     # (1, tile_hw)
        soft_sum = jnp.sum(soft * col_valid, axis=1, keepdims=True)   # (K, 1)
    else:
        soft_sum = jnp.sum(soft, axis=1, keepdims=True)     # (K, 1)

    vlad_ref[0] += (
        lax.dot_general(soft, xn, (((1,), (1,)), ((), ())),
                        preferred_element_type=jnp.float32)  # (K, C)
        - cents * soft_sum)

    # --- weighted residual, streamed per K-chunk straight into the output
    #     block (no full (K, C, tile_hw) VMEM temporaries)
    xn_b = xn[None, :, :]                                   # hoisted out of the loop
    cents_col = cents[:, :, None]                           # (K, C, 1)
    for k0 in range(0, K, k_chunk):                         # static loop (K is static)
        k1 = min(k0 + k_chunk, K)
        sb = soft[k0:k1][:, None, :]                        # (kc, 1, tile_hw)
        cb = cents_col[k0:k1]                               # (kc, C, 1)
        res_ref[0, k0:k1] = (xn_b - cb) * sb                # (kc, C, tile_hw)


def netvlad_forward(x, conv_w, centroids, *, res_tile_budget_bytes=None):
    """x: (N, C, H, W) float32; conv_w: (K, C); centroids: (K, C)."""
    N, C, H, W = x.shape
    K = conv_w.shape[0]
    HW = H * W

    # --- generation-aware VMEM budgets
    try:
        vmem_cap = int(pltpu.get_tpu_info().vmem_capacity_bytes)
    except Exception:
        vmem_cap = 64 << 20                       # conservative fallback
    if vmem_cap <= (64 << 20):                    # v7x: 64 MiB per TensorCore
        auto_budget, vmem_limit = 16 << 20, 40 << 20
    else:                                         # v5e / v6e: 128 MiB
        auto_budget, vmem_limit = 72 << 20, 96 << 20
    if res_tile_budget_bytes is None:
        res_tile_budget_bytes = auto_budget

    # --- hw tile: multiple of 128, divisor of the 128-aligned pixel count,
    #     sized so the residual output block(s) stay within budget.
    hw128 = ((HW + 127) // 128) * 128
    m = hw128 // 128
    col_bytes = K * C * 4                         # one f32 residual column
    res_buffers = 2
    cols_budget = res_tile_budget_bytes // (res_buffers * col_bytes)
    if cols_budget < 128:
        # Large K*C: single-buffer the residual writeback so a 128-wide tile
        # still fits.
        # TODO(synk): for K*C so large that even this exceeds physical VMEM,
        # split K across an extra grid axis with soft in a resident scratch.
        res_buffers = 1
        cols_budget = max(128, res_tile_budget_bytes // col_bytes)
    d_max = max(1, min(m, cols_budget // 128))
    d = max(dd for dd in range(1, d_max + 1) if m % dd == 0)
    tile_hw = 128 * d
    num_hw_tiles = m // d
    hw_padded = hw128                             # tile_hw divides hw128 exactly

    # megacore coverage (v7x) when N is odd: split the hw-tile range in two
    hw_split = 2 if (N % 2 == 1 and num_hw_tiles % 2 == 0) else 1
    T = num_hw_tiles // hw_split

    # keep each unrolled residual chunk around ~2 MiB
    k_chunk = max(1, min(K, (2 << 20) // max(1, C * tile_hw * 4)))

    # raise the vmem limit if the chosen configuration needs it (fallback path)
    need_bytes = (res_buffers * K * C * tile_hw * 4
                  + 2 * (C + K) * tile_hw * 4
                  + 6 * K * C * 4)
    if need_bytes + (4 << 20) > vmem_limit:
        vmem_limit = min(need_bytes + (4 << 20),
                         max(vmem_cap - (8 << 20), vmem_limit))

    x_flat = x.reshape(N, C, HW)
    if hw_padded != HW:
        x_flat = jnp.pad(x_flat, ((0, 0), (0, 0), (0, hw_padded - HW)))

    kernel = functools.partial(
        netvlad_kernel,
        hw_valid=HW, hw_padded=hw_padded, tile_hw=tile_hw, k_chunk=k_chunk)

    res_spec_kwargs = {}
    if res_buffers == 1:
        res_spec_kwargs["pipeline_mode"] = pl.Buffered(1)

    soft, res, vlad_parts = pl.pallas_call(
        kernel,
        out_shape=(
            jax.ShapeDtypeStruct((N, K, hw_padded), jnp.float32),
            jax.ShapeDtypeStruct((N, K, C, hw_padded), jnp.float32),
            jax.ShapeDtypeStruct((N * hw_split, K, C), jnp.float32),
        ),
        grid_spec=pltpu.PrefetchScalarGridSpec(
            num_scalar_prefetch=0,
            grid=(N, hw_split, T),                # hw (vlad reduction) innermost
            in_specs=[
                pl.BlockSpec((1, C, tile_hw), lambda n, s, t: (n, 0, s * T + t)),
                pl.BlockSpec((K, C), lambda n, s, t: (0, 0)),
                pl.BlockSpec((K, C), lambda n, s, t: (0, 0)),
            ],
            out_specs=[
                pl.BlockSpec((1, K, tile_hw), lambda n, s, t: (n, 0, s * T + t)),
                pl.BlockSpec((1, K, C, tile_hw),
                             lambda n, s, t: (n, 0, 0, s * T + t),
                             **res_spec_kwargs),
                pl.BlockSpec((1, K, C),
                             lambda n, s, t: (n * hw_split + s, 0, 0)),  # accumulator
            ],
        ),
        compiler_params=pltpu.CompilerParams(
            dimension_semantics=("parallel", "parallel", "arbitrary"),
            vmem_limit_bytes=vmem_limit,
        ),
    )(x_flat, conv_w, centroids)

    vlad = vlad_parts.reshape(N, hw_split, K, C).sum(axis=1)

    if hw_padded != HW:     # only slice (extra copy of the big tensor) when padded
        soft = soft[:, :, :HW]
        res = res[:, :, :, :HW]
    return soft.reshape(N, K, H, W), res, vlad


def netvlad_reference(x, conv_w, centroids):
    """Pure-JAX reference mirroring the PyTorch forward."""
    N, C, H, W = x.shape
    K = conv_w.shape[0]
    norm = jnp.sqrt(jnp.sum(x * x, axis=1, keepdims=True))
    xn = x / jnp.maximum(norm, 1e-12)
    logits = jnp.einsum("kc,nchw->nkhw", conv_w, xn,
                        precision=lax.Precision.HIGHEST).reshape(N, K, -1)
    soft = jax.nn.softmax(logits, axis=1)
    x_flat = xn.reshape(N, C, -1)
    resid = x_flat[:, None, :, :] - centroids[None, :, :, None]
    weighted = resid * soft[:, :, None, :]
    vlad = jnp.sum(weighted, axis=-1)
    return soft.reshape(N, K, H, W), weighted, vlad


if __name__ == "__main__":
    # Small, deterministic shapes consistent with the module:
    #   batch N=2, descriptor dim C=32, clusters K=8, spatial H=8, W=16 (HW=128)
    N, C, K, H, W = 2, 32, 8, 8, 16

    key = jax.random.PRNGKey(0)
    kx, kw, kc = jax.random.split(key, 3)
    x = jax.random.normal(kx, (N, C, H, W), dtype=jnp.float32)
    # nn.Conv2d(dim, K, 1, bias=False) weight: (K, C, 1, 1) -> squeezed to (K, C)
    conv_w = jax.random.normal(kw, (K, C), dtype=jnp.float32) * 0.1
    # centroids: torch.rand(K, dim) -> uniform [0, 1)
    centroids = jax.random.uniform(kc, (K, C), dtype=jnp.float32)

    soft, res, vlad = netvlad_forward(x, conv_w, centroids)
    jax.block_until_ready((soft, res, vlad))

    # sanity check against pure-JAX reference
    soft_r, res_r, vlad_r = netvlad_reference(x, conv_w, centroids)
    assert jnp.allclose(soft, soft_r, atol=1e-4), "soft_assign mismatch"
    assert jnp.allclose(res, res_r, atol=1e-4), "residual mismatch"
    assert jnp.allclose(vlad, vlad_r, atol=1e-3), "vlad mismatch"

    # Also exercise the multi-tile / megacore-split / padded-pixel paths with
    # a tiny forced residual-tile budget (N odd, HW not 128-aligned, 2 tiles).
    N2, H2, W2 = 1, 10, 20
    x2 = jax.random.normal(kx, (N2, C, H2, W2), dtype=jnp.float32)
    soft2, res2, vlad2 = netvlad_forward(
        x2, conv_w, centroids, res_tile_budget_bytes=2 * K * C * 4 * 128)
    jax.block_until_ready((soft2, res2, vlad2))
    soft2_r, res2_r, vlad2_r = netvlad_reference(x2, conv_w, centroids)
    assert jnp.allclose(soft2, soft2_r, atol=1e-4), "soft_assign mismatch (cfg2)"
    assert jnp.allclose(res2, res2_r, atol=1e-4), "residual mismatch (cfg2)"
    assert jnp.allclose(vlad2, vlad2_r, atol=1e-3), "vlad mismatch (cfg2)"

    print("KERNEL_OK")
</pallas_src>

<mosaic_0001>
module attributes {stable_mosaic.version = 11 : i64} {
  func.func @netvlad_kernel(%arg0: i32, %arg1: i32, %arg2: i32, %arg3: memref<1x32x128xf32, #tpu.memory_space<vmem>>, %arg4: memref<8x32xf32, #tpu.memory_space<vmem>>, %arg5: memref<8x32xf32, #tpu.memory_space<vmem>>, %arg6: memref<1x8x128xf32, #tpu.memory_space<vmem>>, %arg7: memref<1x8x32x128xf32, #tpu.memory_space<vmem>>, %arg8: memref<1x8x32xf32, #tpu.memory_space<vmem>>) attributes {dimension_semantics = [#tpu.dimension_semantics<parallel>, #tpu.dimension_semantics<parallel>, #tpu.dimension_semantics<arbitrary>], iteration_bounds = array<i64: 2, 1, 1>, scalar_prefetch = 0 : i64, scratch_operands = 0 : i64, tpu.core_type = #tpu.core_type<tc>, window_params = [{transform_indices = @transform_0, window_bounds = array<i64: 1, 32, 128>}, {pipeline_mode = #tpu.pipeline_mode<synchronous>, transform_indices = @transform_1, window_bounds = array<i64: 8, 32>}, {pipeline_mode = #tpu.pipeline_mode<synchronous>, transform_indices = @transform_2, window_bounds = array<i64: 8, 32>}, {transform_indices = @transform_3, window_bounds = array<i64: 1, 8, 128>}, {transform_indices = @transform_4, window_bounds = array<i64: 1, 8, 32, 128>}, {transform_indices = @transform_5, window_bounds = array<i64: 1, 8, 32>}]} {
    %c0 = arith.constant 0 : index
    %c0_0 = arith.constant 0 : index
    %c0_1 = arith.constant 0 : index
    %0 = vector.load %arg3[%c0, %c0_0, %c0_1] : memref<1x32x128xf32, #tpu.memory_space<vmem>>, vector<1x32x128xf32>
    %1 = vector.shape_cast %0 : vector<1x32x128xf32> to vector<32x128xf32>
    %c0_2 = arith.constant 0 : index
    %c0_3 = arith.constant 0 : index
    %2 = vector.load %arg4[%c0_2, %c0_3] : memref<8x32xf32, #tpu.memory_space<vmem>>, vector<8x32xf32>
    %c0_4 = arith.constant 0 : index
    %c0_5 = arith.constant 0 : index
    %3 = vector.load %arg5[%c0_4, %c0_5] : memref<8x32xf32, #tpu.memory_space<vmem>>, vector<8x32xf32>
    %4 = arith.mulf %1, %1 : vector<32x128xf32>
    %cst = arith.constant dense<0.000000e+00> : vector<128xf32>
    %5 = vector.multi_reduction <add>, %4, %cst [0] : vector<32x128xf32> to vector<128xf32>
    %6 = vector.shape_cast %5 : vector<128xf32> to vector<1x128xf32>
    %cst_6 = arith.constant 1.000000e-24 : f32
    %7 = vector.broadcast %cst_6 : f32 to vector<1x128xf32>
    %8 = arith.maximumf %6, %7 : vector<1x128xf32>
    %9 = math.rsqrt %8 : vector<1x128xf32>
    %10 = vector.broadcast %9 : vector<1x128xf32> to vector<32x128xf32>
    %11 = arith.mulf %1, %10 : vector<32x128xf32>
    %cst_7 = arith.constant dense<0.000000e+00> : vector<8x128xf32>
    %12 = tpu.matmul %2, %11, %cst_7 {dimension_numbers = #tpu.dot_dimension_numbers<[1], [0], [0], [1], [0, 0, 1, 1], [], []>} : vector<8x32xf32>, vector<32x128xf32>, vector<8x128xf32> -> vector<8x128xf32>
    %cst_8 = arith.constant dense<0xFF800000> : vector<128xf32>
    %13 = vector.multi_reduction <maximumf>, %12, %cst_8 [0] : vector<8x128xf32> to vector<128xf32>
    %14 = vector.shape_cast %13 : vector<128xf32> to vector<1x128xf32>
    %15 = vector.broadcast %14 : vector<1x128xf32> to vector<8x128xf32>
    %16 = arith.subf %12, %15 : vector<8x128xf32>
    %17 = math.exp %16 : vector<8x128xf32>
    %cst_9 = arith.constant dense<0.000000e+00> : vector<128xf32>
    %18 = vector.multi_reduction <add>, %17, %cst_9 [0] : vector<8x128xf32> to vector<128xf32>
    %19 = vector.shape_cast %18 : vector<128xf32> to vector<1x128xf32>
    %20 = tpu.reciprocal %19 {approx = true} : vector<1x128xf32> -> vector<1x128xf32>
    %21 = arith.mulf %19, %20 : vector<1x128xf32>
    %cst_10 = arith.constant 2.000000e+00 : f32
    %22 = vector.broadcast %cst_10 : f32 to vector<1x128xf32>
    %23 = arith.subf %22, %21 : vector<1x128xf32>
    %24 = arith.mulf %20, %23 : vector<1x128xf32>
    %25 = arith.mulf %19, %24 : vector<1x128xf32>
    %cst_11 = arith.constant 2.000000e+00 : f32
    %26 = vector.broadcast %cst_11 : f32 to vector<1x128xf32>
    %27 = arith.subf %26, %25 : vector<1x128xf32>
    %28 = arith.mulf %24, %27 : vector<1x128xf32>
    %29 = vector.broadcast %28 : vector<1x128xf32> to vector<8x128xf32>
    %30 = arith.mulf %17, %29 : vector<8x128xf32>
    %c0_12 = arith.constant 0 : index
    %c0_13 = arith.constant 0 : index
    %c0_14 = arith.constant 0 : index
    %31 = vector.load %arg6[%c0_12, %c0_13, %c0_14] : memref<1x8x128xf32, #tpu.memory_space<vmem>>, vector<1x8x128xf32>
    %32 = vector.shape_cast %31 : vector<1x8x128xf32> to vector<8x128xf32>
    %33 = vector.shape_cast %30 : vector<8x128xf32> to vector<1x8x128xf32>
    tpu.vector_store %arg6[%c0_12, %c0_13, %c0_14], %33 {strides = array<i32>} : memref<1x8x128xf32, #tpu.memory_space<vmem>>, vector<1x8x128xf32>,
    %c0_i32 = arith.constant 0 : i32
    %34 = arith.cmpi eq, %arg2, %c0_i32 : i32
    %35 = arith.extui %34 : i1 to i32
    %c0_i32_15 = arith.constant 0 : i32
    %36 = arith.cmpi ne, %35, %c0_i32_15 : i32
    scf.if %36 {
      %cst_28 = arith.constant 0.000000e+00 : f32
      %60 = vector.broadcast %cst_28 : f32 to vector<1x8x32xf32>
      %c0_29 = arith.constant 0 : index
      %c0_30 = arith.constant 0 : index
      %c0_31 = arith.constant 0 : index
      %61 = vector.load %arg8[%c0_29, %c0_30, %c0_31] : memref<1x8x32xf32, #tpu.memory_space<vmem>>, vector<1x8x32xf32>
      tpu.vector_store %arg8[%c0_29, %c0_30, %c0_31], %60 {strides = array<i32>} : memref<1x8x32xf32, #tpu.memory_space<vmem>>, vector<1x8x32xf32>,
    } else {
    }
    %cst_16 = arith.constant dense<0.000000e+00> : vector<8xf32>
    %37 = vector.multi_reduction <add>, %30, %cst_16 [1] : vector<8x128xf32> to vector<8xf32>
    %38 = vector.shape_cast %37 : vector<8xf32> to vector<8x1xf32>
    %c0_17 = arith.constant 0 : index
    %c0_18 = arith.constant 0 : index
    %c0_19 = arith.constant 0 : index
    %39 = vector.load %arg8[%c0_17, %c0_18, %c0_19] : memref<1x8x32xf32, #tpu.memory_space<vmem>>, vector<1x8x32xf32>
    %40 = vector.shape_cast %39 : vector<1x8x32xf32> to vector<8x32xf32>
    %cst_20 = arith.constant dense<0.000000e+00> : vector<8x32xf32>
    %41 = tpu.matmul %30, %11, %cst_20 {dimension_numbers = #tpu.dot_dimension_numbers<[1], [1], [0], [0], [0, 0, 1, 0], [], []>} : vector<8x128xf32>, vector<32x128xf32>, vector<8x32xf32> -> vector<8x32xf32>
    %42 = vector.broadcast %38 : vector<8x1xf32> to vector<8x32xf32>
    %43 = arith.mulf %3, %42 : vector<8x32xf32>
    %44 = arith.subf %41, %43 : vector<8x32xf32>
    %45 = arith.addf %40, %44 : vector<8x32xf32>
    %c0_21 = arith.constant 0 : index
    %c0_22 = arith.constant 0 : index
    %c0_23 = arith.constant 0 : index
    %46 = vector.load %arg8[%c0_21, %c0_22, %c0_23] : memref<1x8x32xf32, #tpu.memory_space<vmem>>, vector<1x8x32xf32>
    %47 = vector.shape_cast %46 : vector<1x8x32xf32> to vector<8x32xf32>
    %48 = vector.shape_cast %45 : vector<8x32xf32> to vector<1x8x32xf32>
    tpu.vector_store %arg8[%c0_21, %c0_22, %c0_23], %48 {strides = array<i32>} : memref<1x8x32xf32, #tpu.memory_space<vmem>>, vector<1x8x32xf32>,
    %49 = vector.shape_cast %11 : vector<32x128xf32> to vector<1x32x128xf32>
    %50 = vector.shape_cast %3 : vector<8x32xf32> to vector<8x32x1xf32>
    %51 = vector.shape_cast %30 : vector<8x128xf32> to vector<8x1x128xf32>
    %52 = vector.broadcast %49 : vector<1x32x128xf32> to vector<8x32x128xf32>
    %53 = vector.broadcast %50 : vector<8x32x1xf32> to vector<8x32x128xf32>
    %54 = arith.subf %52, %53 : vector<8x32x128xf32>
    %55 = vector.broadcast %51 : vector<8x1x128xf32> to vector<8x32x128xf32>
    %56 = arith.mulf %54, %55 : vector<8x32x128xf32>
    %c0_24 = arith.constant 0 : index
    %c0_25 = arith.constant 0 : index
    %c0_26 = arith.constant 0 : index
    %c0_27 = arith.constant 0 : index
    %57 = vector.load %arg7[%c0_24, %c0_25, %c0_26, %c0_27] : memref<1x8x32x128xf32, #tpu.memory_space<vmem>>, vector<1x8x32x128xf32>
    %58 = vector.shape_cast %57 : vector<1x8x32x128xf32> to vector<8x32x128xf32>
    %59 = vector.shape_cast %56 : vector<8x32x128xf32> to vector<1x8x32x128xf32>
    tpu.vector_store %arg7[%c0_24, %c0_25, %c0_26, %c0_27], %59 {strides = array<i32>} : memref<1x8x32x128xf32, #tpu.memory_space<vmem>>, vector<1x8x32x128xf32>,
    return
  }
  func.func @transform_0(%arg0: i32, %arg1: i32, %arg2: i32) -> (i32, i32, i32) {
    %c1_i32 = arith.constant 1 : i32
    %0 = arith.muli %arg1, %c1_i32 : i32
    %1 = arith.addi %0, %arg2 : i32
    %c0_i32 = arith.constant 0 : i32
    %c0_i32_0 = arith.constant 0 : i32
    return %arg0, %c0_i32, %1 : i32, i32, i32
  }
  func.func @transform_1(%arg0: i32, %arg1: i32, %arg2: i32) -> (i32, i32) {
    %c0_i32 = arith.constant 0 : i32
    %c0_i32_0 = arith.constant 0 : i32
    %c0_i32_1 = arith.constant 0 : i32
    return %c0_i32, %c0_i32_0 : i32, i32
  }
  func.func @transform_2(%arg0: i32, %arg1: i32, %arg2: i32) -> (i32, i32) {
    %c0_i32 = arith.constant 0 : i32
    %c0_i32_0 = arith.constant 0 : i32
    %c0_i32_1 = arith.constant 0 : i32
    return %c0_i32, %c0_i32_0 : i32, i32
  }
  func.func @transform_3(%arg0: i32, %arg1: i32, %arg2: i32) -> (i32, i32, i32) {
    %c1_i32 = arith.constant 1 : i32
    %0 = arith.muli %arg1, %c1_i32 : i32
    %1 = arith.addi %0, %arg2 : i32
    %c0_i32 = arith.constant 0 : i32
    %c0_i32_0 = arith.constant 0 : i32
    return %arg0, %c0_i32, %1 : i32, i32, i32
  }
  func.func @transform_4(%arg0: i32, %arg1: i32, %arg2: i32) -> (i32, i32, i32, i32) {
    %c1_i32 = arith.constant 1 : i32
    %0 = arith.muli %arg1, %c1_i32 : i32
    %1 = arith.addi %0, %arg2 : i32
    %c0_i32 = arith.constant 0 : i32
    %c0_i32_0 = arith.constant 0 : i32
    %c0_i32_1 = arith.constant 0 : i32
    return %arg0, %c0_i32, %c0_i32_0, %1 : i32, i32, i32, i32
  }
  func.func @transform_5(%arg0: i32, %arg1: i32, %arg2: i32) -> (i32, i32, i32) {
    %c1_i32 = arith.constant 1 : i32
    %0 = arith.muli %arg0, %c1_i32 : i32
    %1 = arith.addi %0, %arg1 : i32
    %c0_i32 = arith.constant 0 : i32
    %c0_i32_0 = arith.constant 0 : i32
    %c0_i32_1 = arith.constant 0 : i32
    return %1, %c0_i32, %c0_i32_0 : i32, i32, i32
  }
}

</mosaic_0001>

<llo_original>
// kernel: tpu_custom_call.1
$region0: #{tpu_custom_call.1}
  #allocation0 [shape = 'u32[]', space=smem, size = 0x4, offset = 0x4, fixed_abs, tag = 'smem constant byte address 0x4 - core index']
  #allocation1 [shape = 'u32[72,128]{1,0:T(1,128)}', space=vmem, size = 0x9000, scoped, tag = 'internal scratch']
  %s0 = inlined_call_operand.hbm [shape: f32[2,32,128], index: 0, kind: input, shape index: {}]
  %s1 = inlined_call_operand.hbm [shape: f32[8,32], index: 1, kind: input, shape index: {}]
  %s2 = inlined_call_operand.hbm [shape: f32[8,32], index: 2, kind: input, shape index: {}]
  %s3 = inlined_call_operand.hbm [shape: f32[2,8,128], index: 3, kind: output, shape index: {0}]
  %s4 = inlined_call_operand.hbm [shape: f32[2,8,32,128], index: 4, kind: output, shape index: {1}]
  %s5 = inlined_call_operand.hbm [shape: f32[2,8,32], index: 5, kind: output, shape index: {2}]
  %6 = xla_tuple %s3, %s4, %s5
  %s7 = sld [smem:[#allocation0]]
  $region77: #{tpu_custom_call.1} parent=0
    _
  %s9 = ssub.s32 1, %s7
  %s10 = scalar_select 0, %s9, %s7
  $region1: #{tpu_custom_call.1} parent=0
    #allocation2 [shape = 'u8[32768]{0}', space=vmem, size = 0x8000, scoped, tag = 'input window, operand 0']
    #allocation3 [shape = 's32[2]{0}', space=sflag, size = 0x8, scoped, tag = 'scoped memory for tpu_custom_call.1']
    #allocation4 [shape = 's32[2]{0}', space=sflag, size = 0x8, scoped, tag = 'scoped memory for tpu_custom_call.1']
    #allocation5 [shape = 'u8[4096]{0}', space=vmem, size = 0x1000, scoped, tag = 'input window, operand 1, single buffered']
    #allocation6 [shape = 's32[1]{0}', space=sflag, size = 0x4, scoped, tag = 'scoped memory for tpu_custom_call.1']
    #allocation7 [shape = 'u8[4096]{0}', space=vmem, size = 0x1000, scoped, tag = 'input window, operand 2, single buffered']
    #allocation8 [shape = 'u8[8192]{0}', space=vmem, size = 0x2000, scoped, tag = 'output window, operand 0']
    #allocation9 [shape = 'u8[262144]{0}', space=vmem, size = 0x40000, scoped, tag = 'output window, operand 1']
    #allocation10 [shape = 's32[2]{0}', space=sflag, size = 0x8, scoped, tag = 'scoped memory for tpu_custom_call.1']
    #allocation11 [shape = 'u8[8192]{0}', space=vmem, size = 0x2000, scoped, tag = 'output window, operand 2']
    %11 = vsyncpa [#allocation3], 0
    %s12 = scalar_lea.sflag [#allocation3], 1
    %13 = vsyncpa %s12, 0
    %14 = vsyncpa [#allocation6], 0
    %15 = vsyncpa [#allocation4], 0
    %s16 = scalar_lea.sflag [#allocation4], 1
    %17 = vsyncpa %s16, 0
    %18 = vsyncpa [#allocation10], 0
    %s19 = scalar_lea.sflag [#allocation10], 1
    %20 = vsyncpa %s19, 0
    loop: start=0, step=1, limit=4
    $region2: #{tpu_custom_call.1} parent=1 // loop_pre_header
      _
    $region3: #{tpu_custom_call.1} parent=1 // loop_header
      %s22 = sphi 0, %s26
      %p23 = scmp.ge.s32.totalorder %s22, 4
      %s29 = sphi 0, %s48
      %s30 = sphi 0, %s44
      %s31 = sphi 0, %s40
      %s32 = sphi 0, %s29
      %s33 = sphi 0, %s30
      %s34 = sphi 0, %s31
      %s35 = sphi 0, %s32
      %s36 = sphi 0, %s33
      %s37 = sphi 0, %s34
      %s55 = sphi 0, %s57
      %s58 = sphi 0, %s55
      %s59 = sphi 0, %s58
      %s75 = sphi 0, %s59
      %s79 = sphi 0, %s79
      %s81 = sphi 0, %s79
      %s82 = sphi 0, %s81
      %s96 = sphi 0, %s82
      %s100 = sphi 0, %s100
      %s102 = sphi 0, %s100
      %s103 = sphi 0, %s102
      %s117 = sphi 0, %s103
      %s127 = sphi 0, %s129
      %s130 = sphi 0, %s127
      %s131 = sphi 0, %s130
      %s147 = sphi 0, %s131
      %s157 = sphi 0, %s159
      %s160 = sphi 0, %s157
      %s161 = sphi 0, %s160
      %s177 = sphi 0, %s161
      %s185 = sphi 0, %s187
      %s188 = sphi 0, %s185
      %s189 = sphi 0, %s188
      %s205 = sphi 0, %s189
    $region4: #{tpu_custom_call.1} parent=1 // loop_header_branch
      %25 = sbr.rel (%p23) target = $region8
    $region5: #{tpu_custom_call.1} parent=1 // loop_body
      %s27 = ssub.s32 %s22, 1
      %s28 = ssub.s32 %s22, 2
      %s38 = sadd.s32 1, %s31
      %p39 = scmp.ge.s32.totalorder %s38, 1
      %s40 = scalar_select %p39, 0, %s38
      %s41 = sadd.s32 1, %s30
      %s42 = scalar_select %p39, %s41, %s30
      %p43 = scmp.ge.s32.totalorder %s42, 1
      %s44 = scalar_select %p43, 0, %s42
      %s45 = sadd.s32 1, %s29
      %s46 = scalar_select %p43, %s45, %s29
      %p47 = scmp.ge.s32.totalorder %s46, 2
      %s48 = scalar_select %p47, 0, %s46
      %s49 = sadd.s32 %s30, %s31
      %s50 = sadd.s32 %s44, %s40
      %s51 = ssub.s32 %s29, %s48
      %s52 = ssub.s32 %s49, %s50
      %s53 = sor.u32 %s51, %s52
      %p54 = scmp.eq.s32.totalorder %s53, 0
      %s56 = sadd.s32 %s55, 1
      %s57 = scalar_select %p54, %s55, %s56
      %p60 = pneg %p54
      %p61 = scmp.eq.s32.totalorder %s22, 1
      %p62 = por %p60, %p61
      %p63 = scmp.ne.s32.totalorder %s55, %s58
      %p64 = scmp.eq.s32.totalorder %s22, 0
      %p65 = por %p63, %p64
      %p66 = scmp.ne.s32.totalorder %s55, %s58
      %p67 = scmp.eq.s32.totalorder %s27, 1
      %p68 = por %p66, %p67
      %p69 = scmp.ne.s32.totalorder %s58, %s59
      %p70 = scmp.eq.s32.totalorder %s27, 0
      %p71 = por %p69, %p70
      %p72 = scmp.ne.s32.totalorder %s58, %s59
      %p73 = scmp.eq.s32.totalorder %s28, 1
      %p74 = por %p72, %p73
      %p76 = scmp.ne.s32.totalorder %s59, %s75
      %p77 = scmp.eq.s32.totalorder %s28, 0
      %p78 = por %p76, %p77
      %s80 = sadd.s32 %s79, 1
      %p83 = scmp.eq.s32.totalorder %s22, 1
      %p84 = scmp.ne.s32.totalorder %s79, %s81
      %p85 = scmp.eq.s32.totalorder %s22, 0
      %p86 = por %p84, %p85
      %p87 = scmp.ne.s32.totalorder %s79, %s81
      %p88 = scmp.eq.s32.totalorder %s27, 1
      %p89 = por %p87, %p88
      %p90 = scmp.ne.s32.totalorder %s81, %s82
      %p91 = scmp.eq.s32.totalorder %s27, 0
      %p92 = por %p90, %p91
      %p93 = scmp.ne.s32.totalorder %s81, %s82
      %p94 = scmp.eq.s32.totalorder %s28, 1
      %p95 = por %p93, %p94
      %p97 = scmp.ne.s32.totalorder %s82, %s96
      %p98 = scmp.eq.s32.totalorder %s28, 0
      %p99 = por %p97, %p98
      %s101 = sadd.s32 %s100, 1
      %p104 = scmp.eq.s32.totalorder %s22, 1
      %p105 = scmp.ne.s32.totalorder %s100, %s102
      %p106 = scmp.eq.s32.totalorder %s22, 0
      %p107 = por %p105, %p106
      %p108 = scmp.ne.s32.totalorder %s100, %s102
      %p109 = scmp.eq.s32.totalorder %s27, 1
      %p110 = por %p108, %p109
      %p111 = scmp.ne.s32.totalorder %s102, %s103
      %p112 = scmp.eq.s32.totalorder %s27, 0
      %p113 = por %p111, %p112
      %p114 = scmp.ne.s32.totalorder %s102, %s103
      %p115 = scmp.eq.s32.totalorder %s28, 1
      %p116 = por %p114, %p115
      %p118 = scmp.ne.s32.totalorder %s103, %s117
      %p119 = scmp.eq.s32.totalorder %s28, 0
      %p120 = por %p118, %p119
      %s121 = sadd.s32 %s30, %s31
      %s122 = sadd.s32 %s44, %s40
      %s123 = ssub.s32 %s29, %s48
      %s124 = ssub.s32 %s121, %s122
      %s125 = sor.u32 %s123, %s124
      %p126 = scmp.eq.s32.totalorder %s125, 0
      %s128 = sadd.s32 %s127, 1
      %s129 = scalar_select %p126, %s127, %s128
      %p132 = pneg %p126
      %p133 = scmp.eq.s32.totalorder %s22, 1
      %p134 = por %p132, %p133
      %p135 = scmp.ne.s32.totalorder %s127, %s130
      %p136 = scmp.eq.s32.totalorder %s22, 0
      %p137 = por %p135, %p136
      %p138 = scmp.ne.s32.totalorder %s127, %s130
      %p139 = scmp.eq.s32.totalorder %s27, 1
      %p140 = por %p138, %p139
      %p141 = scmp.ne.s32.totalorder %s130, %s131
      %p142 = scmp.eq.s32.totalorder %s27, 0
      %p143 = por %p141, %p142
      %p144 = scmp.ne.s32.totalorder %s130, %s131
      %p145 = scmp.eq.s32.totalorder %s28, 1
      %p146 = por %p144, %p145
      %p148 = scmp.ne.s32.totalorder %s131, %s147
      %p149 = scmp.eq.s32.totalorder %s28, 0
      %p150 = por %p148, %p149
      %s151 = sadd.s32 %s30, %s31
      %s152 = sadd.s32 %s44, %s40
      %s153 = ssub.s32 %s29, %s48
      %s154 = ssub.s32 %s151, %s152
      %s155 = sor.u32 %s153, %s154
      %p156 = scmp.eq.s32.totalorder %s155, 0
      %s158 = sadd.s32 %s157, 1
      %s159 = scalar_select %p156, %s157, %s158
      %p162 = pneg %p156
      %p163 = scmp.eq.s32.totalorder %s22, 1
      %p164 = por %p162, %p163
      %p165 = scmp.ne.s32.totalorder %s157, %s160
      %p166 = scmp.eq.s32.totalorder %s22, 0
      %p167 = por %p165, %p166
      %p168 = scmp.ne.s32.totalorder %s157, %s160
      %p169 = scmp.eq.s32.totalorder %s27, 1
      %p170 = por %p168, %p169
      %p171 = scmp.ne.s32.totalorder %s160, %s161
      %p172 = scmp.eq.s32.totalorder %s27, 0
      %p173 = por %p171, %p172
      %p174 = scmp.ne.s32.totalorder %s160, %s161
      %p175 = scmp.eq.s32.totalorder %s28, 1
      %p176 = por %p174, %p175
      %p178 = scmp.ne.s32.totalorder %s161, %s177
      %p179 = scmp.eq.s32.totalorder %s28, 0
      %p180 = por %p178, %p179
      %s181 = sadd.s32 %s29, %s30
      %s182 = sadd.s32 %s48, %s44
      %s183 = ssub.s32 %s181, %s182
      %p184 = scmp.eq.s32.totalorder %s183, 0
      %s186 = sadd.s32 %s185, 1
      %s187 = scalar_select %p184, %s185, %s186
      %p190 = pneg %p184
      %p191 = scmp.eq.s32.totalorder %s22, 1
      %p192 = por %p190, %p191
      %p193 = scmp.ne.s32.totalorder %s185, %s188
      %p194 = scmp.eq.s32.totalorder %s22, 0
      %p195 = por %p193, %p194
      %p196 = scmp.ne.s32.totalorder %s185, %s188
      %p197 = scmp.eq.s32.totalorder %s27, 1
      %p198 = por %p196, %p197
      %p199 = scmp.ne.s32.totalorder %s188, %s189
      %p200 = scmp.eq.s32.totalorder %s27, 0
      %p201 = por %p199, %p200
      %p202 = scmp.ne.s32.totalorder %s188, %s189
      %p203 = scmp.eq.s32.totalorder %s28, 1
      %p204 = por %p202, %p203
      %p206 = scmp.ne.s32.totalorder %s189, %s205
      %p207 = scmp.eq.s32.totalorder %s28, 0
      %p208 = por %p206, %p207
      %p209 = scmp.le.s32.totalorder 1, %s22
      %p210 = scmp.lt.s32.totalorder %s22, 3
      %p211 = pnand %p209, %p210
      %p212 = pneg %p211
      // Predicated region
      $region9: #{tpu_custom_call.1} parent=5 // pred_check
        _
      $region10: #{tpu_custom_call.1} parent=5 // pred_check_branch
        %214 = sbr.rel (%p211) target = $region12
      $region11: #{tpu_custom_call.1} parent=5 // pred_region
        %s215 = ssub.s32 %s22, 1
        // Predicated region
        $region13: #{tpu_custom_call.1} parent=11 // pred_check
          %p216 = pneg %p92
        $region14: #{tpu_custom_call.1} parent=11 // pred_check_branch
          %218 = sbr.rel (%p216) target = $region16
        $region15: #{tpu_custom_call.1} parent=11 // pred_region
          %220 = vsyncadd [#allocation6], 0
          %s222 = sshll.u32 %s1, 4
          %s223 = int_to_ptr.hbm [resolvable:$true] %s222
          %s224 = sshll.u32 [#allocation5], 4
          %s225 = int_to_ptr.vmem [resolvable:$true] %s224
          %227 = dma.hbm_to_vmem [thread:$0]  %s223, 128, %s225, [#allocation6]
        $region16: #{tpu_custom_call.1} parent=11 // pred_fallthru
          _
        // Predicated region
        $region17: #{tpu_custom_call.1} parent=11 // pred_check
          %p228 = pneg %p113
        $region18: #{tpu_custom_call.1} parent=11 // pred_check_branch
          %230 = sbr.rel (%p228) target = $region20
        $region19: #{tpu_custom_call.1} parent=11 // pred_region
          %232 = vsyncadd [#allocation6], 0
          %s234 = sshll.u32 %s2, 4
          %s235 = int_to_ptr.hbm [resolvable:$true] %s234
          %s236 = sshll.u32 [#allocation7], 4
          %s237 = int_to_ptr.vmem [resolvable:$true] %s236
          %239 = dma.hbm_to_vmem [thread:$0]  %s235, 128, %s237, [#allocation6]
        $region20: #{tpu_custom_call.1} parent=11 // pred_fallthru
          _
      $region12: #{tpu_custom_call.1} parent=5 // pred_fallthru
        _
      %p240 = scmp.lt.s32.totalorder %s22, 2
      // Predicated region
      $region21: #{tpu_custom_call.1} parent=5 // pred_check
        %p241 = pneg %p240
      $region22: #{tpu_custom_call.1} parent=5 // pred_check_branch
        %243 = sbr.rel (%p241) target = $region24
      $region23: #{tpu_custom_call.1} parent=5 // pred_region
        // Predicated region
        $region25: #{tpu_custom_call.1} parent=23 // pred_check
          %p244 = pneg %p65
        $region26: #{tpu_custom_call.1} parent=23 // pred_check_branch
          %246 = sbr.rel (%p244) target = $region28
        $region27: #{tpu_custom_call.1} parent=23 // pred_region
          %s247 = sand.u32 %s55, 1
          %s248 = scalar_lea.sflag [#allocation3], %s247
          %s249 = sand.u32 %s55, 1
          %s250 = smul.addr %s249, 32
          %s251 = scalar_lea.vmem [#allocation2], %s250
          %s252 = sadd.s32 %s30, %s31
          %254 = vsyncadd %s248, 0
          %s255 = smul.addr %s29, 4
          %s256 = sadd.s32 %s252, %s255
          %s257 = smul.addr %s256, 8
          %s258 = scalar_lea.hbm %s0, %s257
          %s259 = sshll.u32 %s258, 4
          %s260 = int_to_ptr.hbm [resolvable:$true] %s259
          %s261 = sshll.u32 %s251, 4
          %s262 = int_to_ptr.vmem [resolvable:$true] %s261
          %267 = dma.hbm_to_vmem [thread:$0]  %s260, 512, %s262, %s248, 128, 128, 8
        $region28: #{tpu_custom_call.1} parent=23 // pred_fallthru
          _
      $region24: #{tpu_custom_call.1} parent=5 // pred_fallthru
        _
      %p268 = scmp.le.s32.totalorder 1, %s22
      %p269 = scmp.lt.s32.totalorder %s22, 3
      %p270 = pnand %p268, %p269
      %p271 = pneg %p270
      // Predicated region
      $region29: #{tpu_custom_call.1} parent=5 // pred_check
        _
      $region30: #{tpu_custom_call.1} parent=5 // pred_check_branch
        %273 = sbr.rel (%p270) target = $region32
      $region31: #{tpu_custom_call.1} parent=5 // pred_region
        %s274 = ssub.s32 %s22, 1
        %s275 = sand.u32 %s58, 1
        %s276 = scalar_lea.sflag [#allocation3], %s275
        %s277 = sand.u32 %s58, 1
        %s278 = smul.addr %s277, 32
        %s279 = scalar_lea.vmem [#allocation2], %s278
        // Predicated region
        $region33: #{tpu_custom_call.1} parent=31 // pred_check
          %p280 = pneg %p71
        $region34: #{tpu_custom_call.1} parent=31 // pred_check_branch
          %282 = sbr.rel (%p280) target = $region36
        $region35: #{tpu_custom_call.1} parent=31 // pred_region
          %284 = dma.done %s276, 512
        $region36: #{tpu_custom_call.1} parent=31 // pred_fallthru
          _
        // Predicated region
        $region37: #{tpu_custom_call.1} parent=31 // pred_check
          %p285 = pneg %p92
        $region38: #{tpu_custom_call.1} parent=31 // pred_check_branch
          %287 = sbr.rel (%p285) target = $region40
        $region39: #{tpu_custom_call.1} parent=31 // pred_region
          %289 = dma.done [#allocation6], 128
        $region40: #{tpu_custom_call.1} parent=31 // pred_fallthru
          _
        // Predicated region
        $region41: #{tpu_custom_call.1} parent=31 // pred_check
          %p290 = pneg %p113
        $region42: #{tpu_custom_call.1} parent=31 // pred_check_branch
          %292 = sbr.rel (%p290) target = $region44
        $region43: #{tpu_custom_call.1} parent=31 // pred_region
          %294 = dma.done [#allocation6], 128
        $region44: #{tpu_custom_call.1} parent=31 // pred_fallthru
          _
        %s295 = sand.u32 %s58, 1
        %s296 = scalar_lea.sflag [#allocation3], %s295
        %s297 = sand.u32 %s58, 1
        %s298 = smul.addr %s297, 32
        %s299 = scalar_lea.vmem [#allocation2], %s298
        %p300 = pneg %p71
        %p301 = pneg %p68
        %p302 = pneg %p92
        %p303 = pneg %p89
        %p304 = pneg %p113
        %p305 = pneg %p110
        %p306 = pneg %p143
        %p307 = pneg %p140
        %s308 = sand.u32 %s130, 1
        %s309 = scalar_lea.sflag [#allocation4], %s308
        %s310 = sand.u32 %s130, 1
        %s311 = smul.addr %s310, 8
        %s312 = scalar_lea.vmem [#allocation8], %s311
        %p313 = pneg %p173
        %p314 = pneg %p170
        %s315 = sand.u32 %s27, 1
        %s316 = scalar_lea.sflag [#allocation10], %s315
        %s317 = sand.u32 %s160, 1
        %s318 = smul.addr %s317, 256
        %s319 = scalar_lea.vmem [#allocation9], %s318
        %p320 = pneg %p201
        %p321 = pneg %p198
        %s322 = sand.u32 %s27, 1
        %s323 = scalar_lea.sflag [#allocation10], %s322
        %s324 = sand.u32 %s188, 1
        %s325 = smul.addr %s324, 8
        %s326 = scalar_lea.vmem [#allocation11], %s325
        %s327 = sadd.s32 %s33, %s34
        %s328 = sadd.s32 %s33, %s34
        %s329 = sadd.s32 %s33, %s34
        %s330 = sadd.s32 %s32, %s33
        %v331 = vld [vmem:[%s279] sm:$0xff]
        %v332 = vld [vmem:[%s279 + $0x8] sm:$0xff]
        %v333 = vld [vmem:[%s279 + $0x10] sm:$0xff]
        %v334 = vld [vmem:[%s279 + $0x18] sm:$0xff]
        %v335 = vld [vmem:[#allocation5] sm:$0xff]
        %v336 = vld [vmem:[#allocation7] sm:$0xff]
        %v337 = vmul.f32 %v331, %v331
        %v338 = vmul.f32 %v332, %v332
        %v339 = vmul.f32 %v333, %v333
        %v340 = vmul.f32 %v334, %v334
        %v341 = vadd.f32 %v337, %v338
        %v342 = vadd.f32 %v341, %v339
        %v343 = vadd.f32 %v342, %v340
        %v344 = vrot.slane %v343, 4
        %v345 = vadd.f32 %v343, %v344
        %v346 = vrot.slane %v345, 2
        %v347 = vadd.f32 %v345, %v346
        %v348 = vrot.slane %v347, 1
        %v349 = vadd.f32 %v347, %v348
        %v350 = vmax.f32 %v349, 1e-24
        %v351 = vrsqrt.pop %v350
        %v352 = vmul.f32 %v351, %v350
        %v353 = vmul.f32 %v352, %v351
        %v354 = vmul.f32 0.5, %v353
        %v355 = vsub.f32 1.5, %v354
        %v356 = vmul.f32 %v351, %v355
        %vm357 = vweird.f32 %v350
        %vm358 = vweird.f32 %v351
        %vm359 = vmor %vm357, %vm358
        %v360 = vsel %vm359, %v351, %v356
        %v361 = vmul.f32 %v331, %v360
        %v362 = vmul.f32 %v332, %v360
        %v363 = vmul.f32 %v333, %v360
        %v364 = vmul.f32 %v334, %v360
        %vm365 = vcmask 261120
        %v367 = vsel %vm365, %v335, 0
        %369 = vmatpush.msra.mxu0 0.0
        %370 = vmatpush.msra.mxu0 0.0
        %371 = vmatpush.msra.mxu0 0.0
        %372 = vmatpush.msra.mxu0 0.0
        %373 = vmatpush.msra.mxu0 0.0
        %374 = vmatpush.msra.mxu0 0.0
        %375 = vmatpush.msra.mxu0 0.0
        %376 = vmatpush.msra.mxu0 0.0
        %377 = vmatpush.msra.mxu0 0.0
        %378 = vmatpush.msra.mxu0 0.0
        %379 = vmatpush.msra.mxu0 0.0
        %380 = vmatpush.msra.mxu0 0.0
        %381 = vmatpush.msra.mxu0 %v364
        %382 = vmatpush.msra.mxu0 %v363
        %383 = vmatpush.msra.mxu0 %v362
        %384 = vmatpush.msra.mxu0 %v361
        %385 = vmatmul.f32.gmra.mxu0 %v367
        %v386 = vpop.f32.mrf.mxu0
        %v387 = vadd.f32 0.0, %v386
        %388 = vdwg.mxu0
        %v389 = vrot.slane %v387, 4
        %v390 = vmax.f32 %v387, %v389
        %v391 = vrot.slane %v390, 2
        %v392 = vmax.f32 %v390, %v391
        %v393 = vrot.slane %v392, 1
        %v394 = vmax.f32 %v392, %v393
        %v395 = vsub.f32 %v387, %v394
        %v396 = vmul.f32 %v395, 1.442695
        %v397 = vpow.pop %v396
        %v398 = vrot.slane %v397, 4
        %v399 = vadd.f32 %v397, %v398
        %v400 = vrot.slane %v399, 2
        %v401 = vadd.f32 %v399, %v400
        %v402 = vrot.slane %v401, 1
        %v403 = vadd.f32 %v401, %v402
        %v404 = vrcp.pop %v403
        %v405 = vmul.f32 %v403, %v404
        %v406 = vsub.f32 2.0, %v405
        %v407 = vmul.f32 %v404, %v406
        %v408 = vmul.f32 %v403, %v407
        %v409 = vsub.f32 2.0, %v408
        %v410 = vmul.f32 %v407, %v409
        %v411 = vmul.f32 %v397, %v410
        %412 = vst [vmem:[%s312] sm:$0xff] %v411
        %p413 = scmp.eq.s32.totalorder %s34, 0
        // Predicated region
        $region45: #{tpu_custom_call.1} parent=31 // pred_check
          %p414 = pneg %p413
        $region46: #{tpu_custom_call.1} parent=31 // pred_check_branch
          %416 = sbr.rel (%p414) target = $region48
        $region47: #{tpu_custom_call.1} parent=31 // pred_region
          %417 = vst.msk [vmem:[%s326] sm:$0xff] %vm365, 0.0
        $region48: #{tpu_custom_call.1} parent=31 // pred_fallthru
          _
        %418 = vadd.xlane.f32.xlu0 %v411
        %v419 = vpop.xlane.xlu0 %418
        %v420 = vld [vmem:[%s326] sm:$0xff]
        %421 = vmatpush.xpose.msra.mxu0 0.0
        %422 = vmatpush.xpose.msra.mxu0 0.0
        %423 = vmatpush.xpose.msra.mxu0 0.0
        %424 = vmatpush.xpose.msra.mxu0 0.0
        %425 = vmatpush.xpose.msra.mxu0 0.0
        %426 = vmatpush.xpose.msra.mxu0 0.0
        %427 = vmatpush.xpose.msra.mxu0 0.0
        %428 = vmatpush.xpose.msra.mxu0 0.0
        %429 = vmatpush.xpose.msra.mxu0 0.0
        %430 = vmatpush.xpose.msra.mxu0 0.0
        %431 = vmatpush.xpose.msra.mxu0 0.0
        %432 = vmatpush.xpose.msra.mxu0 0.0
        %433 = vmatpush.xpose.msra.mxu0 %v364
        %434 = vmatpush.xpose.msra.mxu0 %v363
        %435 = vmatpush.xpose.msra.mxu0 %v362
        %436 = vmatpush.xpose.msra.mxu0 %v361
        %437 = vmatmul.f32.gmra.mxu0 %v411
        %v438 = vpop.f32.mrf.mxu0
        %v439 = vadd.f32 0.0, %v438
        %440 = vdwg.mxu0
        %v441 = vmul.f32 %v336, %v419
        %v442 = vsub.f32 %v439, %v441
        %v443 = vadd.f32 %v420, %v442
        %444 = vst.msk [vmem:[%s326] sm:$0xff] %vm365, %v443
        %v445 = vperm.slane %v336, 0
        %v446 = vlaneseq
        %v447 = vshrl.u32 %v446, 7
        %449 = vset.pattern.permute.xlu0 %v447
        %450 = vperm.xlu0 %449, %v445
        %v451 = vpop.permute.xlu0 %450
        %v452 = vlaneseq
        %v453 = vshrl.u32 %v452, 7
        %v454 = vadd.s32 %v453, 8
        %455 = vset.pattern.permute.xlu0 %v454
        %456 = vperm.xlu0 %455, %v445
        %v457 = vpop.permute.xlu0 %456
        %v458 = vlaneseq
        %v459 = vshrl.u32 %v458, 7
        %v460 = vadd.s32 %v459, 16
        %461 = vset.pattern.permute.xlu0 %v460
        %462 = vperm.xlu0 %461, %v445
        %v463 = vpop.permute.xlu0 %462
        %v464 = vlaneseq
        %v465 = vshrl.u32 %v464, 7
        %v466 = vadd.s32 %v465, 24
        %467 = vset.pattern.permute.xlu0 %v466
        %468 = vperm.xlu0 %467, %v445
        %v469 = vpop.permute.xlu0 %468
        %v470 = vperm.slane %v336, 1
        %v471 = vlaneseq
        %v472 = vshrl.u32 %v471, 7
        %474 = vset.pattern.permute.xlu0 %v472
        %475 = vperm.xlu0 %474, %v470
        %v476 = vpop.permute.xlu0 %475
        %v477 = vlaneseq
        %v478 = vshrl.u32 %v477, 7
        %v479 = vadd.s32 %v478, 8
        %480 = vset.pattern.permute.xlu0 %v479
        %481 = vperm.xlu0 %480, %v470
        %v482 = vpop.permute.xlu0 %481
        %v483 = vlaneseq
        %v484 = vshrl.u32 %v483, 7
        %v485 = vadd.s32 %v484, 16
        %486 = vset.pattern.permute.xlu0 %v485
        %487 = vperm.xlu0 %486, %v470
        %v488 = vpop.permute.xlu0 %487
        %v489 = vlaneseq
        %v490 = vshrl.u32 %v489, 7
        %v491 = vadd.s32 %v490, 24
        %492 = vset.pattern.permute.xlu0 %v491
        %493 = vperm.xlu0 %492, %v470
        %v494 = vpop.permute.xlu0 %493
        %v495 = vperm.slane %v336, 2
        %v496 = vlaneseq
        %v497 = vshrl.u32 %v496, 7
        %499 = vset.pattern.permute.xlu0 %v497
        %500 = vperm.xlu0 %499, %v495
        %v501 = vpop.permute.xlu0 %500
        %v502 = vlaneseq
        %v503 = vshrl.u32 %v502, 7
        %v504 = vadd.s32 %v503, 8
        %505 = vset.pattern.permute.xlu0 %v504
        %506 = vperm.xlu0 %505, %v495
        %v507 = vpop.permute.xlu0 %506
        %v508 = vlaneseq
        %v509 = vshrl.u32 %v508, 7
        %v510 = vadd.s32 %v509, 16
        %511 = vset.pattern.permute.xlu0 %v510
        %512 = vperm.xlu0 %511, %v495
        %v513 = vpop.permute.xlu0 %512
        %v514 = vlaneseq
        %v515 = vshrl.u32 %v514, 7
        %v516 = vadd.s32 %v515, 24
        %517 = vset.pattern.permute.xlu0 %v516
        %518 = vperm.xlu0 %517, %v495
        %v519 = vpop.permute.xlu0 %518
        %v520 = vperm.slane %v336, 3
        %v521 = vlaneseq
        %v522 = vshrl.u32 %v521, 7
        %524 = vset.pattern.permute.xlu0 %v522
        %525 = vperm.xlu0 %524, %v520
        %v526 = vpop.permute.xlu0 %525
        %v527 = vlaneseq
        %v528 = vshrl.u32 %v527, 7
        %v529 = vadd.s32 %v528, 8
        %530 = vset.pattern.permute.xlu0 %v529
        %531 = vperm.xlu0 %530, %v520
        %v532 = vpop.permute.xlu0 %531
        %v533 = vlaneseq
        %v534 = vshrl.u32 %v533, 7
        %v535 = vadd.s32 %v534, 16
        %536 = vset.pattern.permute.xlu0 %v535
        %537 = vperm.xlu0 %536, %v520
        %v538 = vpop.permute.xlu0 %537
        %v539 = vlaneseq
        %v540 = vshrl.u32 %v539, 7
        %v541 = vadd.s32 %v540, 24
        %542 = vset.pattern.permute.xlu0 %v541
        %543 = vperm.xlu0 %542, %v520
        %v544 = vpop.permute.xlu0 %543
        %v545 = vperm.slane %v336, 4
        %v546 = vlaneseq
        %v547 = vshrl.u32 %v546, 7
        %549 = vset.pattern.permute.xlu0 %v547
        %550 = vperm.xlu0 %549, %v545
        %v551 = vpop.permute.xlu0 %550
        %v552 = vlaneseq
        %v553 = vshrl.u32 %v552, 7
        %v554 = vadd.s32 %v553, 8
        %555 = vset.pattern.permute.xlu0 %v554
        %556 = vperm.xlu0 %555, %v545
        %v557 = vpop.permute.xlu0 %556
        %v558 = vlaneseq
        %v559 = vshrl.u32 %v558, 7
        %v560 = vadd.s32 %v559, 16
        %561 = vset.pattern.permute.xlu0 %v560
        %562 = vperm.xlu0 %561, %v545
        %v563 = vpop.permute.xlu0 %562
        %v564 = vlaneseq
        %v565 = vshrl.u32 %v564, 7
        %v566 = vadd.s32 %v565, 24
        %567 = vset.pattern.permute.xlu0 %v566
        %568 = vperm.xlu0 %567, %v545
        %v569 = vpop.permute.xlu0 %568
        %v570 = vperm.slane %v336, 5
        %v571 = vlaneseq
        %v572 = vshrl.u32 %v571, 7
        %574 = vset.pattern.permute.xlu0 %v572
        %575 = vperm.xlu0 %574, %v570
        %v576 = vpop.permute.xlu0 %575
        %v577 = vlaneseq
        %v578 = vshrl.u32 %v577, 7
        %v579 = vadd.s32 %v578, 8
        %580 = vset.pattern.permute.xlu0 %v579
        %581 = vperm.xlu0 %580, %v570
        %v582 = vpop.permute.xlu0 %581
        %v583 = vlaneseq
        %v584 = vshrl.u32 %v583, 7
        %v585 = vadd.s32 %v584, 16
        %586 = vset.pattern.permute.xlu0 %v585
        %587 = vperm.xlu0 %586, %v570
        %v588 = vpop.permute.xlu0 %587
        %v589 = vlaneseq
        %v590 = vshrl.u32 %v589, 7
        %v591 = vadd.s32 %v590, 24
        %592 = vset.pattern.permute.xlu0 %v591
        %593 = vperm.xlu0 %592, %v570
        %v594 = vpop.permute.xlu0 %593
        %v595 = vperm.slane %v336, 6
        %v596 = vlaneseq
        %v597 = vshrl.u32 %v596, 7
        %599 = vset.pattern.permute.xlu0 %v597
        %600 = vperm.xlu0 %599, %v595
        %v601 = vpop.permute.xlu0 %600
        %v602 = vlaneseq
        %v603 = vshrl.u32 %v602, 7
        %v604 = vadd.s32 %v603, 8
        %605 = vset.pattern.permute.xlu0 %v604
        %606 = vperm.xlu0 %605, %v595
        %v607 = vpop.permute.xlu0 %606
        %v608 = vlaneseq
        %v609 = vshrl.u32 %v608, 7
        %v610 = vadd.s32 %v609, 16
        %611 = vset.pattern.permute.xlu0 %v610
        %612 = vperm.xlu0 %611, %v595
        %v613 = vpop.permute.xlu0 %612
        %v614 = vlaneseq
        %v615 = vshrl.u32 %v614, 7
        %v616 = vadd.s32 %v615, 24
        %617 = vset.pattern.permute.xlu0 %v616
        %618 = vperm.xlu0 %617, %v595
        %v619 = vpop.permute.xlu0 %618
        %v620 = vperm.slane %v336, 7
        %v621 = vlaneseq
        %v622 = vshrl.u32 %v621, 7
        %624 = vset.pattern.permute.xlu0 %v622
        %625 = vperm.xlu0 %624, %v620
        %v626 = vpop.permute.xlu0 %625
        %v627 = vlaneseq
        %v628 = vshrl.u32 %v627, 7
        %v629 = vadd.s32 %v628, 8
        %630 = vset.pattern.permute.xlu0 %v629
        %631 = vperm.xlu0 %630, %v620
        %v632 = vpop.permute.xlu0 %631
        %v633 = vlaneseq
        %v634 = vshrl.u32 %v633, 7
        %v635 = vadd.s32 %v634, 16
        %636 = vset.pattern.permute.xlu0 %v635
        %637 = vperm.xlu0 %636, %v620
        %v638 = vpop.permute.xlu0 %637
        %v639 = vlaneseq
        %v640 = vshrl.u32 %v639, 7
        %v641 = vadd.s32 %v640, 24
        %642 = vset.pattern.permute.xlu0 %v641
        %643 = vperm.xlu0 %642, %v620
        %v644 = vpop.permute.xlu0 %643
        %v646 = vrot.slane %v411, 1
        %v647 = vrot.slane %v411, 2
        %v648 = vrot.slane %v411, 3
        %v649 = vrot.slane %v411, 4
        %v650 = vrot.slane %v411, 5
        %v651 = vrot.slane %v411, 6
        %v652 = vrot.slane %v411, 7
        %v653 = vsub.f32 %v361, %v451
        %v654 = vsub.f32 %v362, %v457
        %v655 = vsub.f32 %v363, %v463
        %v656 = vsub.f32 %v364, %v469
        %v657 = vsub.f32 %v361, %v476
        %v658 = vsub.f32 %v362, %v482
        %v659 = vsub.f32 %v363, %v488
        %v660 = vsub.f32 %v364, %v494
        %v661 = vsub.f32 %v361, %v501
        %v662 = vsub.f32 %v362, %v507
        %v663 = vsub.f32 %v363, %v513
        %v664 = vsub.f32 %v364, %v519
        %v665 = vsub.f32 %v361, %v526
        %v666 = vsub.f32 %v362, %v532
        %v667 = vsub.f32 %v363, %v538
        %v668 = vsub.f32 %v364, %v544
        %v669 = vsub.f32 %v361, %v551
        %v670 = vsub.f32 %v362, %v557
        %v671 = vsub.f32 %v363, %v563
        %v672 = vsub.f32 %v364, %v569
        %v673 = vsub.f32 %v361, %v576
        %v674 = vsub.f32 %v362, %v582
        %v675 = vsub.f32 %v363, %v588
        %v676 = vsub.f32 %v364, %v594
        %v677 = vsub.f32 %v361, %v601
        %v678 = vsub.f32 %v362, %v607
        %v679 = vsub.f32 %v363, %v613
        %v680 = vsub.f32 %v364, %v619
        %v681 = vsub.f32 %v361, %v626
        %v682 = vsub.f32 %v362, %v632
        %v683 = vsub.f32 %v363, %v638
        %v684 = vsub.f32 %v364, %v644
        %v685 = vperm.slane %v411, 0
        %v686 = vperm.slane %v646, 0
        %v687 = vperm.slane %v647, 0
        %v688 = vperm.slane %v648, 0
        %v689 = vperm.slane %v649, 0
        %v690 = vperm.slane %v650, 0
        %v691 = vperm.slane %v651, 0
        %v692 = vperm.slane %v652, 0
        %v701 = vmul.f32 %v653, %v685
        %v702 = vmul.f32 %v654, %v685
        %v703 = vmul.f32 %v655, %v685
        %v704 = vmul.f32 %v656, %v685
        %v705 = vmul.f32 %v657, %v686
        %v706 = vmul.f32 %v658, %v686
        %v707 = vmul.f32 %v659, %v686
        %v708 = vmul.f32 %v660, %v686
        %v709 = vmul.f32 %v661, %v687
        %v710 = vmul.f32 %v662, %v687
        %v711 = vmul.f32 %v663, %v687
        %v712 = vmul.f32 %v664, %v687
        %v713 = vmul.f32 %v665, %v688
        %v714 = vmul.f32 %v666, %v688
        %v715 = vmul.f32 %v667, %v688
        %v716 = vmul.f32 %v668, %v688
        %v717 = vmul.f32 %v669, %v689
        %v718 = vmul.f32 %v670, %v689
        %v719 = vmul.f32 %v671, %v689
        %v720 = vmul.f32 %v672, %v689
        %v721 = vmul.f32 %v673, %v690
        %v722 = vmul.f32 %v674, %v690
        %v723 = vmul.f32 %v675, %v690
        %v724 = vmul.f32 %v676, %v690
        %v725 = vmul.f32 %v677, %v691
        %v726 = vmul.f32 %v678, %v691
        %v727 = vmul.f32 %v679, %v691
        %v728 = vmul.f32 %v680, %v691
        %v729 = vmul.f32 %v681, %v692
        %v730 = vmul.f32 %v682, %v692
        %v731 = vmul.f32 %v683, %v692
        %v732 = vmul.f32 %v684, %v692
        %733 = vst [vmem:[%s319] sm:$0xff] %v701
        %734 = vst [vmem:[%s319 + $0x8] sm:$0xff] %v702
        %735 = vst [vmem:[%s319 + $0x10] sm:$0xff] %v703
        %736 = vst [vmem:[%s319 + $0x18] sm:$0xff] %v704
        %737 = vst [vmem:[%s319 + $0x20] sm:$0xff] %v705
        %738 = vst [vmem:[%s319 + $0x28] sm:$0xff] %v706
        %739 = vst [vmem:[%s319 + $0x30] sm:$0xff] %v707
        %740 = vst [vmem:[%s319 + $0x38] sm:$0xff] %v708
        %741 = vst [vmem:[%s319 + $0x40] sm:$0xff] %v709
        %742 = vst [vmem:[%s319 + $0x48] sm:$0xff] %v710
        %743 = vst [vmem:[%s319 + $0x50] sm:$0xff] %v711
        %744 = vst [vmem:[%s319 + $0x58] sm:$0xff] %v712
        %745 = vst [vmem:[%s319 + $0x60] sm:$0xff] %v713
        %746 = vst [vmem:[%s319 + $0x68] sm:$0xff] %v714
        %747 = vst [vmem:[%s319 + $0x70] sm:$0xff] %v715
        %748 = vst [vmem:[%s319 + $0x78] sm:$0xff] %v716
        %749 = vst [vmem:[%s319 + $0x80] sm:$0xff] %v717
        %750 = vst [vmem:[%s319 + $0x88] sm:$0xff] %v718
        %751 = vst [vmem:[%s319 + $0x90] sm:$0xff] %v719
        %752 = vst [vmem:[%s319 + $0x98] sm:$0xff] %v720
        %753 = vst [vmem:[%s319 + $0xa0] sm:$0xff] %v721
        %754 = vst [vmem:[%s319 + $0xa8] sm:$0xff] %v722
        %755 = vst [vmem:[%s319 + $0xb0] sm:$0xff] %v723
        %756 = vst [vmem:[%s319 + $0xb8] sm:$0xff] %v724
        %757 = vst [vmem:[%s319 + $0xc0] sm:$0xff] %v725
        %758 = vst [vmem:[%s319 + $0xc8] sm:$0xff] %v726
        %759 = vst [vmem:[%s319 + $0xd0] sm:$0xff] %v727
        %760 = vst [vmem:[%s319 + $0xd8] sm:$0xff] %v728
        %761 = vst [vmem:[%s319 + $0xe0] sm:$0xff] %v729
        %762 = vst [vmem:[%s319 + $0xe8] sm:$0xff] %v730
        %763 = vst [vmem:[%s319 + $0xf0] sm:$0xff] %v731
        %764 = vst [vmem:[%s319 + $0xf8] sm:$0xff] %v732
        %s765 = sand.u32 %s130, 1
        %s766 = scalar_lea.sflag [#allocation4], %s765
        %s767 = sand.u32 %s130, 1
        %s768 = smul.addr %s767, 8
        %s769 = scalar_lea.vmem [#allocation8], %s768
        %s770 = sand.u32 %s27, 1
        %s771 = scalar_lea.sflag [#allocation10], %s770
        %s772 = sand.u32 %s160, 1
        %s773 = smul.addr %s772, 256
        %s774 = scalar_lea.vmem [#allocation9], %s773
        %s775 = sand.u32 %s27, 1
        %s776 = scalar_lea.sflag [#allocation10], %s775
        %s777 = sand.u32 %s188, 1
        %s778 = smul.addr %s777, 8
        %s779 = scalar_lea.vmem [#allocation11], %s778
        // Predicated region
        $region49: #{tpu_custom_call.1} parent=31 // pred_check
          %p780 = pneg %p140
        $region50: #{tpu_custom_call.1} parent=31 // pred_check_branch
          %782 = sbr.rel (%p780) target = $region52
        $region51: #{tpu_custom_call.1} parent=31 // pred_region
          %s783 = sadd.s32 %s33, %s34
          %785 = vsyncadd %s766, 0
          %s786 = sadd.s32 %s783, %s32
          %s787 = smul.addr %s786, 8
          %s788 = scalar_lea.hbm %s3, %s787
          %s790 = sshll.u32 %s769, 4
          %s791 = int_to_ptr.vmem [resolvable:$true] %s790
          %s792 = sshll.u32 %s788, 4
          %s793 = int_to_ptr.hbm [resolvable:$true] %s792
          %795 = dma.vmem_to_hbm [thread:$0]  %s791, 128, %s793, %s766
        $region52: #{tpu_custom_call.1} parent=31 // pred_fallthru
          _
        // Predicated region
        $region53: #{tpu_custom_call.1} parent=31 // pred_check
          %p796 = pneg %p170
        $region54: #{tpu_custom_call.1} parent=31 // pred_check_branch
          %798 = sbr.rel (%p796) target = $region56
        $region55: #{tpu_custom_call.1} parent=31 // pred_region
          %s799 = sadd.s32 %s33, %s34
          %801 = vsyncadd %s771, 0
          %s802 = smul.addr %s32, 32
          %s803 = sadd.s32 %s799, %s802
          %s804 = smul.addr %s803, 8
          %s805 = scalar_lea.hbm %s4, %s804
          %s806 = sshll.u32 %s774, 4
          %s807 = int_to_ptr.vmem [resolvable:$true] %s806
          %s808 = sshll.u32 %s805, 4
          %s809 = int_to_ptr.hbm [resolvable:$true] %s808
          %814 = dma.vmem_to_hbm [thread:$0]  %s807, 4096, %s809, %s771, 128, 128, 8
        $region56: #{tpu_custom_call.1} parent=31 // pred_fallthru
          _
        // Predicated region
        $region57: #{tpu_custom_call.1} parent=31 // pred_check
          %p815 = pneg %p198
        $region58: #{tpu_custom_call.1} parent=31 // pred_check_branch
          %817 = sbr.rel (%p815) target = $region60
        $region59: #{tpu_custom_call.1} parent=31 // pred_region
          %s818 = sadd.s32 %s32, %s33
          %820 = vsyncadd %s776, 0
          %s821 = smul.addr %s818, 8
          %s822 = scalar_lea.hbm %s5, %s821
          %s824 = sshll.u32 %s779, 4
          %s825 = int_to_ptr.vmem [resolvable:$true] %s824
          %s826 = sshll.u32 %s822, 4
          %s827 = int_to_ptr.hbm [resolvable:$true] %s826
          %829 = dma.vmem_to_hbm [thread:$0]  %s825, 128, %s827, %s776
        $region60: #{tpu_custom_call.1} parent=31 // pred_fallthru
          _
      $region32: #{tpu_custom_call.1} parent=5 // pred_fallthru
        _
      %p830 = scmp.le.s32.totalorder 2, %s22
      // Predicated region
      $region61: #{tpu_custom_call.1} parent=5 // pred_check
        %p831 = pneg %p830
      $region62: #{tpu_custom_call.1} parent=5 // pred_check_branch
        %833 = sbr.rel (%p831) target = $region64
      $region63: #{tpu_custom_call.1} parent=5 // pred_region
        %s834 = ssub.s32 %s22, 2
        // Predicated region
        $region65: #{tpu_custom_call.1} parent=63 // pred_check
          %p835 = pneg %p146
        $region66: #{tpu_custom_call.1} parent=63 // pred_check_branch
          %837 = sbr.rel (%p835) target = $region68
        $region67: #{tpu_custom_call.1} parent=63 // pred_region
          %s838 = sand.u32 %s131, 1
          %s839 = scalar_lea.sflag [#allocation4], %s838
          %s840 = sand.u32 %s131, 1
          %s841 = smul.addr %s840, 8
          %s842 = scalar_lea.vmem [#allocation8], %s841
          %844 = dma.done %s839, 128
        $region68: #{tpu_custom_call.1} parent=63 // pred_fallthru
          _
        // Predicated region
        $region69: #{tpu_custom_call.1} parent=63 // pred_check
          %p845 = pneg %p176
        $region70: #{tpu_custom_call.1} parent=63 // pred_check_branch
          %847 = sbr.rel (%p845) target = $region72
        $region71: #{tpu_custom_call.1} parent=63 // pred_region
          %s848 = sand.u32 %s28, 1
          %s849 = scalar_lea.sflag [#allocation10], %s848
          %s850 = sand.u32 %s161, 1
          %s851 = smul.addr %s850, 256
          %s852 = scalar_lea.vmem [#allocation9], %s851
          %854 = dma.done %s849, 4096
        $region72: #{tpu_custom_call.1} parent=63 // pred_fallthru
          _
        // Predicated region
        $region73: #{tpu_custom_call.1} parent=63 // pred_check
          %p855 = pneg %p204
        $region74: #{tpu_custom_call.1} parent=63 // pred_check_branch
          %857 = sbr.rel (%p855) target = $region76
        $region75: #{tpu_custom_call.1} parent=63 // pred_region
          %s858 = sand.u32 %s28, 1
          %s859 = scalar_lea.sflag [#allocation10], %s858
          %s860 = sand.u32 %s189, 1
          %s861 = smul.addr %s860, 8
          %s862 = scalar_lea.vmem [#allocation11], %s861
          %864 = dma.done %s859, 128
        $region76: #{tpu_custom_call.1} parent=63 // pred_fallthru
          _
      $region64: #{tpu_custom_call.1} parent=5 // pred_fallthru
        _
    $region6: #{tpu_custom_call.1} parent=1 // loop_footer
      %s26 = sadd.s32 1, %s22
    $region7: #{tpu_custom_call.1} parent=1 // loop_footer_branch
      %21 = sbr.rel target = $region3
    $region8: #{tpu_custom_call.1} parent=1 // loop_exit
      _
    %865 = vsyncpa [#allocation3], 1
    %s866 = scalar_lea.sflag [#allocation3], 1
    %867 = vsyncpa %s866, 1
    %868 = vsyncpa [#allocation6], 1
    %869 = vsyncpa [#allocation4], 1
    %s870 = scalar_lea.sflag [#allocation4], 1
    %871 = vsyncpa %s870, 1
    %872 = vsyncpa [#allocation10], 1
    %s873 = scalar_lea.sflag [#allocation10], 1
    %874 = vsyncpa %s873, 1

</llo_original>
